<compile_context>
chip_gen: v7x
topology: tpu7x:2x2x1
jax: 0.10.0
libtpu: 0.0.40
codegen_flags: <defaults>
</compile_context>

<pallas_src>
import functools

import jax
import jax.numpy as jnp
from jax.experimental import pallas as pl
from jax.experimental.pallas import tpu as pltpu

KERNEL = 4
STRIDE = 2
PAD = 1
LEAKY_SLOPE = 0.2
IN_EPS = 1e-5
K_CAP = 4096  # max reduction block (bf16 B block <= 4 MiB at tn=512; safe on v7x 64 MiB)


# ----------------------------------------------------------------------------
# Pallas kernels
# ----------------------------------------------------------------------------
def _gemm_bias_act_kernel(a_ref, b_ref, bias_ref, o_ref, acc_ref, *, activation):
    """(phase-batched) bf16 x bf16 GEMM, f32 scratch accumulation, fused epilogue."""
    @pl.when(pl.program_id(3) == 0)
    def _():
        acc_ref[...] = jnp.zeros_like(acc_ref)

    acc_ref[...] += jnp.dot(a_ref[0], b_ref[0], preferred_element_type=jnp.float32)

    @pl.when(pl.program_id(3) == pl.num_programs(3) - 1)
    def _():
        y = acc_ref[...] + bias_ref[...]           # bias (1, tn) broadcasts over rows
        if activation == "leaky":
            y = jnp.where(y >= 0, y, LEAKY_SLOPE * y)
        elif activation == "relu":
            y = jnp.maximum(y, 0.0)
        elif activation == "tanh":
            y = jnp.tanh(y)
        # activation == "none": identity
        o_ref[0] = y.astype(o_ref.dtype)


def _instance_norm_kernel(x_ref, o_ref, *, inv_hw):
    """One-pass InstanceNorm2d(affine=False, eps=1e-5): stats + normalize fused.

    Zero-padded spatial rows contribute 0 to both sums; inv_hw uses the true H*W.
    """
    x = x_ref[0].astype(jnp.float32)               # (HWp, ct)
    s = jnp.sum(x, axis=0, keepdims=True)
    sq = jnp.sum(x * x, axis=0, keepdims=True)
    mean = s * inv_hw
    var = jnp.maximum(sq * inv_hw - mean * mean, 0.0)   # clamp f32 cancellation
    o_ref[0] = ((x - mean) * jax.lax.rsqrt(var + IN_EPS)).astype(o_ref.dtype)


# ----------------------------------------------------------------------------
# Pallas wrappers
# ----------------------------------------------------------------------------
def _round_up(x, m):
    return ((x + m - 1) // m) * m


def _pick_tiles(M, K, N):
    """Shape-adaptive GEMM tiles: fat single-step blocks for the tiny-M bottleneck
    GEMMs, modest row tiling only for the large-M encoder/decoder layers."""
    # rows (sublane axis)
    if M >= 4096:
        tm = 512
    elif M >= 1024:
        tm = 256
    else:
        tm = _round_up(M, 8)
    Mp = _round_up(M, tm)
    # cols (lane axis): biggest 128-multiple block up to 512 that divides Np
    Np = _round_up(N, 128)
    tn = min(Np, 512)
    while Np % tn:
        tn -= 128
    # reduction: take it all in one step when <= K_CAP (no K padding needed then)
    if K <= K_CAP:
        tk, Kp = K, K
    else:
        Kp = _round_up(K, 128)
        tk = min(K_CAP, Kp)
        while Kp % tk:
            tk -= 128
    return tm, tk, tn, Mp, Kp, Np


def gemm_bias_act(a, b, bias, activation, out_dtype):
    """a:(P,M,K) bf16 @ b:(P,K,N) bf16 + bias:(N,) f32, fused activation -> (P,M,N)."""
    P, M, K = a.shape
    _, _, N = b.shape
    tm, tk, tn, Mp, Kp, Np = _pick_tiles(M, K, N)

    if Mp != M or Kp != K:
        a = jnp.pad(a, ((0, 0), (0, Mp - M), (0, Kp - K)))
    if Kp != K or Np != N:
        b = jnp.pad(b, ((0, 0), (0, Kp - K), (0, Np - N)))
    bias2 = (bias if Np == N else jnp.pad(bias, (0, Np - N)))
    bias2 = bias2.reshape(1, Np).astype(jnp.float32)

    out = pl.pallas_call(
        functools.partial(_gemm_bias_act_kernel, activation=activation),
        out_shape=jax.ShapeDtypeStruct((P, Mp, Np), out_dtype),
        grid=(P, Mp // tm, Np // tn, Kp // tk),
        in_specs=[
            pl.BlockSpec((1, tm, tk), lambda p, i, j, k: (p, i, k)),
            pl.BlockSpec((1, tk, tn), lambda p, i, j, k: (p, k, j)),
            pl.BlockSpec((1, tn), lambda p, i, j, k: (0, j)),
        ],
        out_specs=pl.BlockSpec((1, tm, tn), lambda p, i, j, k: (p, i, j)),
        scratch_shapes=[pltpu.VMEM((tm, tn), jnp.float32)],
        compiler_params=pltpu.CompilerParams(
            dimension_semantics=("parallel", "parallel", "parallel", "arbitrary"),
            vmem_limit_bytes=32 * 1024 * 1024,
        ),
    )(a, b, bias2)
    if Mp != M or Np != N:
        out = out[:, :M, :N]
    return out


def instance_norm(x):
    """InstanceNorm2d(affine=False) on NHWC input, one fused pass, lane-dense."""
    N, H, W, C = x.shape
    HW = H * W
    HWp = _round_up(HW, 8)
    x2 = x.reshape(N, HW, C)
    if HWp != HW:
        x2 = jnp.pad(x2, ((0, 0), (0, HWp - HW), (0, 0)))

    # channel tile: full C when small / unaligned; else shrink so a block stays modest
    ct = C
    if C % 128 == 0:
        while ct % 256 == 0 and HWp * ct * x2.dtype.itemsize > (4 << 20):
            ct //= 2

    spec = pl.BlockSpec((1, HWp, ct), lambda n, c: (n, 0, c))
    out = pl.pallas_call(
        functools.partial(_instance_norm_kernel, inv_hw=1.0 / float(HW)),
        out_shape=jax.ShapeDtypeStruct((N, HWp, C), x.dtype),
        grid=(N, C // ct),
        in_specs=[spec],
        out_specs=spec,
        compiler_params=pltpu.CompilerParams(
            dimension_semantics=("parallel", "parallel"),
            vmem_limit_bytes=32 * 1024 * 1024,
        ),
    )(x2)
    if HWp != HW:
        out = out[:, :HW, :]
    return out.reshape(N, H, W, C)


# ----------------------------------------------------------------------------
# Conv lowering (glue: NHWC im2col; all GEMMs run in Pallas)
# ----------------------------------------------------------------------------
def _im2col_nhwc(x, ksize, stride, pads):
    """x:(N,H,W,C) -> patches (N*Ho*Wo, ksize*ksize*C) with (kh, kw, c) ordering."""
    N, H, W, C = x.shape
    pt, pb, pl_, pr = pads
    Ho = (H + pt + pb - ksize) // stride + 1
    Wo = (W + pl_ + pr - ksize) // stride + 1
    xp = jnp.pad(x, ((0, 0), (pt, pb), (pl_, pr), (0, 0)))
    cols = []
    for kh in range(ksize):
        for kw in range(ksize):
            cols.append(
                xp[:, kh:kh + stride * (Ho - 1) + 1:stride,
                      kw:kw + stride * (Wo - 1) + 1:stride, :]
            )
    col = jnp.stack(cols, axis=3)                    # (N, Ho, Wo, k*k, C)
    return col.reshape(N * Ho * Wo, ksize * ksize * C), Ho, Wo


def conv2d(x, p, activation, out_dtype=jnp.bfloat16):
    """nn.Conv2d(kernel=4, stride=2, padding=1) on bf16 NHWC input."""
    N = x.shape[0]
    patches, Ho, Wo = _im2col_nhwc(x, KERNEL, STRIDE, (PAD, PAD, PAD, PAD))
    y = gemm_bias_act(patches[None], p["w"], p["b"], activation, out_dtype)
    return y[0].reshape(N, Ho, Wo, -1)


def conv_transpose2d(x, p, activation, out_dtype=jnp.bfloat16):
    """nn.ConvTranspose2d(kernel=4, stride=2, padding=1), output_size = 2*H_in.

    Output-parity decomposition: y[2u+rh, 2v+rw] = sum_{dh,dw} x[u+rh+dh-1, v+rw+dw-1]
    * W[kh=3-rh-2dh, kw=3-rw-2dw].  All 4 phase GEMMs run in ONE batched pallas_call.
    """
    N, H, W, C = x.shape
    xp = jnp.pad(x, ((0, 0), (1, 1), (1, 1), (0, 0)))
    phase_patches = []
    for rh in (0, 1):
        for rw in (0, 1):
            cols = []
            for dh in range(2):
                for dw in range(2):
                    cols.append(xp[:, rh + dh:rh + dh + H, rw + dw:rw + dw + W, :])
            col = jnp.stack(cols, axis=3)            # (N, H, W, 4, C)
            phase_patches.append(col.reshape(N * H * W, 4 * C))
    a = jnp.stack(phase_patches, axis=0)             # (4, M, K)

    y = gemm_bias_act(a, p["w"], p["b"], activation, out_dtype)   # (4, M, Cout)
    cout = y.shape[-1]
    y = y.reshape(2, 2, N, H, W, cout)               # (rh, rw, N, H, W, C)
    y = jnp.transpose(y, (2, 3, 0, 4, 1, 5))         # (N, H, rh, W, rw, C)
    return y.reshape(N, 2 * H, 2 * W, cout)          # interleave parities


# ----------------------------------------------------------------------------
# Weight packing (done once at init)
# ----------------------------------------------------------------------------
def _pack_conv_weight(w_oihw):
    """(Cout, Cin, KH, KW) f32 -> (1, KH*KW*Cin, Cout) bf16, (kh, kw, c) ordering."""
    cout = w_oihw.shape[0]
    w = jnp.transpose(w_oihw, (2, 3, 1, 0)).reshape(-1, cout)
    return w.astype(jnp.bfloat16)[None]


def _pack_convT_weight(w_iohw):
    """(Cin, Cout, KH, KW) f32 -> (4, 4*Cin, Cout) bf16; phase p = 2*rh + rw."""
    cin, cout = w_iohw.shape[0], w_iohw.shape[1]
    w_khkw = jnp.transpose(w_iohw, (2, 3, 0, 1))     # (KH, KW, Cin, Cout)
    phases = []
    for rh in (0, 1):
        for rw in (0, 1):
            kh_idx = jnp.array([3 - rh, 1 - rh])     # indexed by dh
            kw_idx = jnp.array([3 - rw, 1 - rw])     # indexed by dw
            w_p = w_khkw[kh_idx][:, kw_idx]          # (2, 2, Cin, Cout)
            phases.append(w_p.reshape(4 * cin, cout))
    return jnp.stack(phases, axis=0).astype(jnp.bfloat16)


# ----------------------------------------------------------------------------
# Model
# ----------------------------------------------------------------------------
def init_params(key, input_channels, output_channels=3):
    """Synthetic kaiming-like init; weights stored GEMM-ready (bf16, phase-stacked)."""
    bc = 64
    layer_defs = [
        ("conv1", input_channels, bc, False),
        ("conv2", bc, 2 * bc, False),
        ("conv3", 2 * bc, 4 * bc, False),
        ("conv4", 4 * bc, 8 * bc, False),
        ("conv5", 8 * bc, 8 * bc, False),
        ("conv6", 8 * bc, 8 * bc, True),
        ("conv7", 16 * bc, 4 * bc, True),
        ("conv8", 8 * bc, 2 * bc, True),
        ("conv9", 4 * bc, bc, True),
        ("conv10", 2 * bc, output_channels, True),
    ]
    params = {}
    for name, cin, cout, transposed in layer_defs:
        key, sub = jax.random.split(key)
        fan_in = cin * KERNEL * KERNEL
        std = (2.0 / fan_in) ** 0.5
        shape = (cin, cout, KERNEL, KERNEL) if transposed else (cout, cin, KERNEL, KERNEL)
        w = jax.random.normal(sub, shape, jnp.float32) * std
        b = jnp.zeros((cout,), jnp.float32)
        params[name] = {"w": _pack_convT_weight(w) if transposed else _pack_conv_weight(w),
                        "b": b}
    return params


def renderer_forward(params, x_nchw):
    x = jnp.transpose(x_nchw, (0, 2, 3, 1)).astype(jnp.bfloat16)   # NCHW -> NHWC, bf16 once
    # Encoder
    a1 = conv2d(x, params["conv1"], "leaky")
    a2 = conv2d(a1, params["conv2"], "leaky")
    n2 = instance_norm(a2)
    a3 = conv2d(n2, params["conv3"], "leaky")
    n3 = instance_norm(a3)
    a4 = conv2d(n3, params["conv4"], "leaky")
    n4 = instance_norm(a4)
    a5 = conv2d(n4, params["conv5"], "relu")
    # Decoder with skip connections (channel concat on the last axis)
    a6 = conv_transpose2d(a5, params["conv6"], "relu")
    n6 = instance_norm(a6)
    m7 = jnp.concatenate([n4, n6], axis=-1)
    a7 = conv_transpose2d(m7, params["conv7"], "relu")
    n7 = instance_norm(a7)
    m8 = jnp.concatenate([n3, n7], axis=-1)
    a8 = conv_transpose2d(m8, params["conv8"], "relu")
    n8 = instance_norm(a8)
    m9 = jnp.concatenate([n2, n8], axis=-1)
    a9 = conv_transpose2d(m9, params["conv9"], "relu")
    n9 = instance_norm(a9)
    m10 = jnp.concatenate([a1, n9], axis=-1)
    a10 = conv_transpose2d(m10, params["conv10"], "tanh", out_dtype=jnp.float32)
    return jnp.transpose(a10, (0, 3, 1, 2))          # NHWC -> NCHW once


if __name__ == "__main__":
    key = jax.random.PRNGKey(0)
    (k_param, k_input, k_cw, k_cx, k_cb, k_tw, k_tx, k_tb) = jax.random.split(key, 8)

    # --- Numeric unit checks of the conv lowerings vs lax references -------------
    def ref_conv2d(x, w_oihw, b):
        w_hwio = jnp.transpose(w_oihw, (2, 3, 1, 0))
        y = jax.lax.conv_general_dilated(
            x, w_hwio, (STRIDE, STRIDE), [(PAD, PAD), (PAD, PAD)],
            dimension_numbers=("NHWC", "HWIO", "NHWC"),
            precision=jax.lax.Precision.HIGHEST)
        return y + b

    def ref_conv_transpose2d(x, w_iohw, b):
        w_hwio = jnp.transpose(w_iohw[:, :, ::-1, ::-1], (2, 3, 0, 1))
        y = jax.lax.conv_general_dilated(
            x, w_hwio, (1, 1), [(KERNEL - 1 - PAD,) * 2] * 2,
            lhs_dilation=(STRIDE, STRIDE),
            dimension_numbers=("NHWC", "HWIO", "NHWC"),
            precision=jax.lax.Precision.HIGHEST)
        return y + b

    # Conv2d check (bf16-rounded operands on both sides; f32 output from Pallas)
    xc = jax.random.normal(k_cx, (2, 8, 8, 16), jnp.float32).astype(jnp.bfloat16)
    wc = jax.random.normal(k_cw, (32, 16, KERNEL, KERNEL), jnp.float32) * 0.1
    bcv = jax.random.normal(k_cb, (32,), jnp.float32) * 0.1
    got = conv2d(xc, {"w": _pack_conv_weight(wc), "b": bcv}, "none", out_dtype=jnp.float32)
    want = ref_conv2d(xc.astype(jnp.float32),
                      wc.astype(jnp.bfloat16).astype(jnp.float32), bcv)
    assert got.shape == want.shape, (got.shape, want.shape)
    assert bool(jnp.allclose(got, want, atol=1e-2, rtol=1e-2)), \
        float(jnp.max(jnp.abs(got - want)))

    # ConvTranspose2d check
    xt = jax.random.normal(k_tx, (2, 4, 4, 16), jnp.float32).astype(jnp.bfloat16)
    wt = jax.random.normal(k_tw, (16, 24, KERNEL, KERNEL), jnp.float32) * 0.1
    btv = jax.random.normal(k_tb, (24,), jnp.float32) * 0.1
    got_t = conv_transpose2d(xt, {"w": _pack_convT_weight(wt), "b": btv}, "none",
                             out_dtype=jnp.float32)
    want_t = ref_conv_transpose2d(xt.astype(jnp.float32),
                                  wt.astype(jnp.bfloat16).astype(jnp.float32), btv)
    assert got_t.shape == (2, 8, 8, 24), got_t.shape
    assert bool(jnp.allclose(got_t, want_t, atol=1e-2, rtol=1e-2)), \
        float(jnp.max(jnp.abs(got_t - want_t)))

    # --- Full forward -------------------------------------------------------------
    # 5x stride-2 halvings -> 1x1 bottleneck requires spatial >= 32.
    input_channels = 4
    x = jax.random.normal(k_input, (2, input_channels, 32, 32), jnp.float32)
    params = init_params(k_param, input_channels, output_channels=3)

    fwd = jax.jit(renderer_forward)
    out = jax.block_until_ready(fwd(params, x))

    assert out.shape == (2, 3, 32, 32), out.shape
    assert out.dtype == jnp.float32
    assert bool(jnp.all(jnp.isfinite(out)))
    assert bool(jnp.all(jnp.abs(out) <= 1.0))  # tanh output range
    print("KERNEL_OK")
</pallas_src>

<mosaic_0001>
module attributes {stable_mosaic.version = 11 : i64} {
  func.func @_gemm_bias_act_kernel(%arg0: i32, %arg1: i32, %arg2: i32, %arg3: i32, %arg4: memref<1x32x256xbf16, #tpu.memory_space<vmem>>, %arg5: memref<1x256x128xbf16, #tpu.memory_space<vmem>>, %arg6: memref<1x128xf32, #tpu.memory_space<vmem>>, %arg7: memref<1x32x128xf32, #tpu.memory_space<vmem>>, %arg8: memref<32x128xf32, #tpu.memory_space<vmem>>) attributes {dimension_semantics = [#tpu.dimension_semantics<parallel>, #tpu.dimension_semantics<parallel>, #tpu.dimension_semantics<parallel>, #tpu.dimension_semantics<arbitrary>], iteration_bounds = array<i64: 1, 1, 1, 1>, scalar_prefetch = 0 : i64, scratch_operands = 1 : i64, tpu.core_type = #tpu.core_type<tc>, window_params = [{transform_indices = @transform_0, window_bounds = array<i64: 1, 32, 256>}, {transform_indices = @transform_1, window_bounds = array<i64: 1, 256, 128>}, {transform_indices = @transform_2, window_bounds = array<i64: 1, 128>}, {transform_indices = @transform_3, window_bounds = array<i64: 1, 32, 128>}]} {
    %c0_i32 = arith.constant 0 : i32
    %0 = arith.cmpi eq, %arg3, %c0_i32 : i32
    %1 = arith.extui %0 : i1 to i32
    %c0_i32_0 = arith.constant 0 : i32
    %2 = arith.cmpi ne, %1, %c0_i32_0 : i32
    scf.if %2 {
      %cst_12 = arith.constant 0.000000e+00 : f32
      %14 = vector.broadcast %cst_12 : f32 to vector<32x128xf32>
      %c0_13 = arith.constant 0 : index
      %c0_14 = arith.constant 0 : index
      %15 = vector.load %arg8[%c0_13, %c0_14] : memref<32x128xf32, #tpu.memory_space<vmem>>, vector<32x128xf32>
      tpu.vector_store %arg8[%c0_13, %c0_14], %14 {strides = array<i32>} : memref<32x128xf32, #tpu.memory_space<vmem>>, vector<32x128xf32>,
    } else {
    }
    %c0 = arith.constant 0 : index
    %c0_1 = arith.constant 0 : index
    %3 = vector.load %arg8[%c0, %c0_1] : memref<32x128xf32, #tpu.memory_space<vmem>>, vector<32x128xf32>
    %c0_2 = arith.constant 0 : index
    %c0_3 = arith.constant 0 : index
    %c0_4 = arith.constant 0 : index
    %4 = vector.load %arg4[%c0_2, %c0_3, %c0_4] : memref<1x32x256xbf16, #tpu.memory_space<vmem>>, vector<1x32x256xbf16>
    %5 = vector.shape_cast %4 : vector<1x32x256xbf16> to vector<32x256xbf16>
    %c0_5 = arith.constant 0 : index
    %c0_6 = arith.constant 0 : index
    %c0_7 = arith.constant 0 : index
    %6 = vector.load %arg5[%c0_5, %c0_6, %c0_7] : memref<1x256x128xbf16, #tpu.memory_space<vmem>>, vector<1x256x128xbf16>
    %7 = vector.shape_cast %6 : vector<1x256x128xbf16> to vector<256x128xbf16>
    %cst = arith.constant dense<0.000000e+00> : vector<32x128xf32>
    %8 = tpu.matmul %5, %7, %cst {dimension_numbers = #tpu.dot_dimension_numbers<[1], [0], [0], [1], [0, 0, 1, 1], [], []>} : vector<32x256xbf16>, vector<256x128xbf16>, vector<32x128xf32> -> vector<32x128xf32>
    %9 = arith.addf %3, %8 : vector<32x128xf32>
    %c0_8 = arith.constant 0 : index
    %c0_9 = arith.constant 0 : index
    %10 = vector.load %arg8[%c0_8, %c0_9] : memref<32x128xf32, #tpu.memory_space<vmem>>, vector<32x128xf32>
    tpu.vector_store %arg8[%c0_8, %c0_9], %9 {strides = array<i32>} : memref<32x128xf32, #tpu.memory_space<vmem>>, vector<32x128xf32>,
    %c0_i32_10 = arith.constant 0 : i32
    %11 = arith.cmpi eq, %arg3, %c0_i32_10 : i32
    %12 = arith.extui %11 : i1 to i32
    %c0_i32_11 = arith.constant 0 : i32
    %13 = arith.cmpi ne, %12, %c0_i32_11 : i32
    scf.if %13 {
      %c0_12 = arith.constant 0 : index
      %c0_13 = arith.constant 0 : index
      %14 = vector.load %arg8[%c0_12, %c0_13] : memref<32x128xf32, #tpu.memory_space<vmem>>, vector<32x128xf32>
      %c0_14 = arith.constant 0 : index
      %c0_15 = arith.constant 0 : index
      %15 = vector.load %arg6[%c0_14, %c0_15] : memref<1x128xf32, #tpu.memory_space<vmem>>, vector<1x128xf32>
      %16 = vector.broadcast %15 : vector<1x128xf32> to vector<32x128xf32>
      %17 = arith.addf %14, %16 : vector<32x128xf32>
      %c0_16 = arith.constant 0 : index
      %c0_17 = arith.constant 0 : index
      %c0_18 = arith.constant 0 : index
      %18 = vector.load %arg7[%c0_16, %c0_17, %c0_18] : memref<1x32x128xf32, #tpu.memory_space<vmem>>, vector<1x32x128xf32>
      %19 = vector.shape_cast %18 : vector<1x32x128xf32> to vector<32x128xf32>
      %20 = vector.shape_cast %17 : vector<32x128xf32> to vector<1x32x128xf32>
      tpu.vector_store %arg7[%c0_16, %c0_17, %c0_18], %20 {strides = array<i32>} : memref<1x32x128xf32, #tpu.memory_space<vmem>>, vector<1x32x128xf32>,
    } else {
    }
    return
  }
  func.func @transform_0(%arg0: i32, %arg1: i32, %arg2: i32, %arg3: i32) -> (i32, i32, i32) {
    %c0_i32 = arith.constant 0 : i32
    return %arg0, %arg1, %arg3 : i32, i32, i32
  }
  func.func @transform_1(%arg0: i32, %arg1: i32, %arg2: i32, %arg3: i32) -> (i32, i32, i32) {
    %c0_i32 = arith.constant 0 : i32
    return %arg0, %arg3, %arg2 : i32, i32, i32
  }
  func.func @transform_2(%arg0: i32, %arg1: i32, %arg2: i32, %arg3: i32) -> (i32, i32) {
    %c0_i32 = arith.constant 0 : i32
    %c0_i32_0 = arith.constant 0 : i32
    return %c0_i32, %arg2 : i32, i32
  }
  func.func @transform_3(%arg0: i32, %arg1: i32, %arg2: i32, %arg3: i32) -> (i32, i32, i32) {
    %c0_i32 = arith.constant 0 : i32
    return %arg0, %arg1, %arg2 : i32, i32, i32
  }
}

</mosaic_0001>

<llo_original>
// kernel: tpu_custom_call.1
$region0: #{tpu_custom_call.1}
  #allocation0 [shape = 'u32[]', space=smem, size = 0x4, offset = 0x4, fixed_abs, tag = 'smem constant byte address 0x4 - core index']
  #allocation1 [shape = 'u32[144,128]{1,0:T(1,128)}', space=vmem, size = 0x12000, scoped, tag = 'internal scratch']
  #allocation2 [shape = 'f32[32,128]{1,0:T(8,128)}', space=vmem, size = 0x4000, scoped, tag = 'scratch operand']
  %s0 = inlined_call_operand.hbm [shape: bf16[1,32,256], index: 0, kind: input, shape index: {}]
  %s1 = inlined_call_operand.hbm [shape: bf16[1,256,128], index: 1, kind: input, shape index: {}]
  %s2 = inlined_call_operand.vmem [shape: f32[1,128], index: 2, kind: input, shape index: {}]
  %s3 = inlined_call_operand.hbm [shape: f32[1,32,128], index: 3, kind: output, shape index: {}]
  %s4 = sld [smem:[#allocation0]]
  $region38: #{tpu_custom_call.1} parent=0
    _
  %s6 = ssub.s32 1, %s4
  %s7 = scalar_select 0, %s6, %s4
  $region1: #{tpu_custom_call.1} parent=0
    #allocation3 [shape = 'u8[16384]{0}', space=vmem, size = 0x4000, scoped, tag = 'input window, operand 0, single buffered']
    #allocation4 [shape = 's32[1]{0}', space=sflag, size = 0x4, scoped, tag = 'scoped memory for tpu_custom_call.1']
    #allocation5 [shape = 's32[1]{0}', space=sflag, size = 0x4, scoped, tag = 'scoped memory for tpu_custom_call.1']
    #allocation6 [shape = 'u8[65536]{0}', space=vmem, size = 0x10000, scoped, tag = 'input window, operand 1, single buffered']
    #allocation7 [shape = 's32[1]{0}', space=sflag, size = 0x4, scoped, tag = 'scoped memory for tpu_custom_call.1']
    #allocation8 [shape = 'u8[16384]{0}', space=vmem, size = 0x4000, scoped, tag = 'output window, operand 0, single buffered']
    %8 = vsyncpa [#allocation4], 0
    %9 = vsyncpa [#allocation7], 0
    %10 = vsyncpa [#allocation5], 0
    // Predicated region
    $region2: #{tpu_custom_call.1} parent=1 // pred_check
      _
    $region3: #{tpu_custom_call.1} parent=1 // pred_check_branch
      %12 = sbr.rel (0) target = $region5
    $region4: #{tpu_custom_call.1} parent=1 // pred_region
      %s14 = ssub.s32 512, 512
      %15 = vsyncadd [#allocation4], %s14
      %s16 = sshll.u32 [#allocation3], 4
      %s17 = int_to_ptr.vmem [resolvable:$true] %s16
      %22 = dma.hbm_to_vmem [thread:$0]  %s0, 512, %s17, [#allocation4], 128, 128, 8
    $region5: #{tpu_custom_call.1} parent=1 // pred_fallthru
      _
    // Predicated region
    $region6: #{tpu_custom_call.1} parent=1 // pred_check
      _
    $region7: #{tpu_custom_call.1} parent=1 // pred_check_branch
      %24 = sbr.rel (0) target = $region9
    $region8: #{tpu_custom_call.1} parent=1 // pred_region
      %s26 = ssub.s32 2048, 2048
      %27 = vsyncadd [#allocation7], %s26
      %s28 = sshll.u32 [#allocation6], 4
      %s29 = int_to_ptr.vmem [resolvable:$true] %s28
      %34 = dma.hbm_to_vmem [thread:$0]  %s1, 2048, %s29, [#allocation7], 64, 64, 4
    $region9: #{tpu_custom_call.1} parent=1 // pred_fallthru
      _
    // Predicated region
    $region10: #{tpu_custom_call.1} parent=1 // pred_check
      _
    $region11: #{tpu_custom_call.1} parent=1 // pred_check_branch
      %36 = sbr.rel (0) target = $region13
    $region12: #{tpu_custom_call.1} parent=1 // pred_region
      _
    $region13: #{tpu_custom_call.1} parent=1 // pred_fallthru
      _
    // Predicated region
    $region14: #{tpu_custom_call.1} parent=1 // pred_check
      _
    $region15: #{tpu_custom_call.1} parent=1 // pred_check_branch
      %38 = sbr.rel (0) target = $region17
    $region16: #{tpu_custom_call.1} parent=1 // pred_region
      %39 = dma.done [#allocation4], 512
    $region17: #{tpu_custom_call.1} parent=1 // pred_fallthru
      _
    // Predicated region
    $region18: #{tpu_custom_call.1} parent=1 // pred_check
      _
    $region19: #{tpu_custom_call.1} parent=1 // pred_check_branch
      %41 = sbr.rel (0) target = $region21
    $region20: #{tpu_custom_call.1} parent=1 // pred_region
      %42 = dma.done [#allocation7], 2048
    $region21: #{tpu_custom_call.1} parent=1 // pred_fallthru
      _
    %p44 = scmp.eq.s32.totalorder 0, 0
    // Predicated region
    $region22: #{tpu_custom_call.1} parent=1 // pred_check
      %p45 = pneg %p44
    $region23: #{tpu_custom_call.1} parent=1 // pred_check_branch
      %47 = sbr.rel (%p45) target = $region25
    $region24: #{tpu_custom_call.1} parent=1 // pred_region
      %48 = vst [vmem:[#allocation2] sm:$0xff] 0.0
      %49 = vst [vmem:[#allocation2 + $0x8] sm:$0xff] 0.0
      %50 = vst [vmem:[#allocation2 + $0x10] sm:$0xff] 0.0
      %51 = vst [vmem:[#allocation2 + $0x18] sm:$0xff] 0.0
    $region25: #{tpu_custom_call.1} parent=1 // pred_fallthru
      _
    %v52 = vld [vmem:[#allocation2] sm:$0xff]
    %v53 = vld [vmem:[#allocation2 + $0x8] sm:$0xff]
    %v54 = vld [vmem:[#allocation2 + $0x10] sm:$0xff]
    %v55 = vld [vmem:[#allocation2 + $0x18] sm:$0xff]
    %v56 = vld [vmem:[#allocation3] sm:$0xff]
    %v57 = vld [vmem:[#allocation3 + $0x8] sm:$0xff]
    %v58 = vld [vmem:[#allocation3 + $0x10] sm:$0xff]
    %v59 = vld [vmem:[#allocation3 + $0x18] sm:$0xff]
    %v60 = vld [vmem:[#allocation6] sm:$0xf]
    %v61 = vld [vmem:[#allocation6 + $0x4] sm:$0xf]
    %v62 = vld [vmem:[#allocation6 + $0x8] sm:$0xf]
    %v63 = vld [vmem:[#allocation6 + $0xc] sm:$0xf]
    %v64 = vld [vmem:[#allocation6 + $0x10] sm:$0xf]
    %v65 = vld [vmem:[#allocation6 + $0x14] sm:$0xf]
    %v66 = vld [vmem:[#allocation6 + $0x18] sm:$0xf]
    %v67 = vld [vmem:[#allocation6 + $0x1c] sm:$0xf]
    %v68 = vld [vmem:[#allocation6 + $0x20] sm:$0xf]
    %v69 = vld [vmem:[#allocation6 + $0x24] sm:$0xf]
    %v70 = vld [vmem:[#allocation6 + $0x28] sm:$0xf]
    %v71 = vld [vmem:[#allocation6 + $0x2c] sm:$0xf]
    %v72 = vld [vmem:[#allocation6 + $0x30] sm:$0xf]
    %v73 = vld [vmem:[#allocation6 + $0x34] sm:$0xf]
    %v74 = vld [vmem:[#allocation6 + $0x38] sm:$0xf]
    %v75 = vld [vmem:[#allocation6 + $0x3c] sm:$0xf]
    %v76 = vld [vmem:[#allocation6 + $0x40] sm:$0xf]
    %v77 = vld [vmem:[#allocation6 + $0x44] sm:$0xf]
    %v78 = vld [vmem:[#allocation6 + $0x48] sm:$0xf]
    %v79 = vld [vmem:[#allocation6 + $0x4c] sm:$0xf]
    %v80 = vld [vmem:[#allocation6 + $0x50] sm:$0xf]
    %v81 = vld [vmem:[#allocation6 + $0x54] sm:$0xf]
    %v82 = vld [vmem:[#allocation6 + $0x58] sm:$0xf]
    %v83 = vld [vmem:[#allocation6 + $0x5c] sm:$0xf]
    %v84 = vld [vmem:[#allocation6 + $0x60] sm:$0xf]
    %v85 = vld [vmem:[#allocation6 + $0x64] sm:$0xf]
    %v86 = vld [vmem:[#allocation6 + $0x68] sm:$0xf]
    %v87 = vld [vmem:[#allocation6 + $0x6c] sm:$0xf]
    %v88 = vld [vmem:[#allocation6 + $0x70] sm:$0xf]
    %v89 = vld [vmem:[#allocation6 + $0x74] sm:$0xf]
    %v90 = vld [vmem:[#allocation6 + $0x78] sm:$0xf]
    %v91 = vld [vmem:[#allocation6 + $0x7c] sm:$0xf]
    %v96 = vunpack.c.l.b16 %v56
    %v97 = vunpack.c.h.b16 %v56
    %v98 = vunpack.c.l.b16 %v57
    %v99 = vunpack.c.h.b16 %v57
    %v100 = vunpack.c.l.b16 %v58
    %v101 = vunpack.c.h.b16 %v58
    %v102 = vunpack.c.l.b16 %v59
    %v103 = vunpack.c.h.b16 %v59
    %v104 = vpack.c.b16 %v98, %v96
    %v105 = vpack.c.b16 %v99, %v97
    %v106 = vpack.c.b16 %v102, %v100
    %v107 = vpack.c.b16 %v103, %v101
    %v144 = vunpack.c.l.b16 %v60
    %v145 = vunpack.c.l.b16 %v61
    %v146 = vunpack.c.l.b16 %v62
    %v147 = vunpack.c.l.b16 %v63
    %v148 = vunpack.c.l.b16 %v64
    %v149 = vunpack.c.l.b16 %v65
    %v150 = vunpack.c.l.b16 %v66
    %v151 = vunpack.c.l.b16 %v67
    %v152 = vunpack.c.l.b16 %v68
    %v153 = vunpack.c.l.b16 %v69
    %v154 = vunpack.c.l.b16 %v70
    %v155 = vunpack.c.l.b16 %v71
    %v156 = vunpack.c.l.b16 %v72
    %v157 = vunpack.c.l.b16 %v73
    %v158 = vunpack.c.l.b16 %v74
    %v159 = vunpack.c.l.b16 %v75
    %v160 = vunpack.c.l.b16 %v76
    %v161 = vunpack.c.l.b16 %v77
    %v162 = vunpack.c.l.b16 %v78
    %v163 = vunpack.c.l.b16 %v79
    %v164 = vunpack.c.l.b16 %v80
    %v165 = vunpack.c.l.b16 %v81
    %v166 = vunpack.c.l.b16 %v82
    %v167 = vunpack.c.l.b16 %v83
    %v168 = vunpack.c.l.b16 %v84
    %v169 = vunpack.c.l.b16 %v85
    %v170 = vunpack.c.l.b16 %v86
    %v171 = vunpack.c.l.b16 %v87
    %v172 = vunpack.c.l.b16 %v88
    %v173 = vunpack.c.l.b16 %v89
    %v174 = vunpack.c.l.b16 %v90
    %v175 = vunpack.c.l.b16 %v91
    %v176 = vpack.c.b16 %v145, %v144
    %v177 = vpack.c.b16 %v147, %v146
    %v178 = vpack.c.b16 %v149, %v148
    %v179 = vpack.c.b16 %v151, %v150
    %v180 = vpack.c.b16 %v153, %v152
    %v181 = vpack.c.b16 %v155, %v154
    %v182 = vpack.c.b16 %v157, %v156
    %v183 = vpack.c.b16 %v159, %v158
    %v184 = vpack.c.b16 %v161, %v160
    %v185 = vpack.c.b16 %v163, %v162
    %v186 = vpack.c.b16 %v165, %v164
    %v187 = vpack.c.b16 %v167, %v166
    %v188 = vpack.c.b16 %v169, %v168
    %v189 = vpack.c.b16 %v171, %v170
    %v190 = vpack.c.b16 %v173, %v172
    %v191 = vpack.c.b16 %v175, %v174
    %208 = vmatprep.subr.bf16.mxu0 0
    %209 = vmatpush1.bf16.msra.mxu0 %v176
    %210 = vmatprep.subr.bf16.mxu0 0
    %211 = vmatpush1.bf16.msra.mxu0 %v177
    %212 = vmatprep.subr.bf16.mxu0 0
    %213 = vmatpush1.bf16.msra.mxu0 %v178
    %214 = vmatprep.subr.bf16.mxu0 0
    %215 = vmatpush1.bf16.msra.mxu0 %v179
    %216 = vmatprep.subr.bf16.mxu0 0
    %217 = vmatpush1.bf16.msra.mxu0 %v180
    %218 = vmatprep.subr.bf16.mxu0 0
    %219 = vmatpush1.bf16.msra.mxu0 %v181
    %220 = vmatprep.subr.bf16.mxu0 0
    %221 = vmatpush1.bf16.msra.mxu0 %v182
    %222 = vmatprep.subr.bf16.mxu0 0
    %223 = vmatpush1.bf16.msra.mxu0 %v183
    %224 = vmatprep.subr.bf16.mxu0 0
    %225 = vmatpush1.bf16.msra.mxu0 %v184
    %226 = vmatprep.subr.bf16.mxu0 0
    %227 = vmatpush1.bf16.msra.mxu0 %v185
    %228 = vmatprep.subr.bf16.mxu0 0
    %229 = vmatpush1.bf16.msra.mxu0 %v186
    %230 = vmatprep.subr.bf16.mxu0 0
    %231 = vmatpush1.bf16.msra.mxu0 %v187
    %232 = vmatprep.subr.bf16.mxu0 0
    %233 = vmatpush1.bf16.msra.mxu0 %v188
    %234 = vmatprep.subr.bf16.mxu0 0
    %235 = vmatpush1.bf16.msra.mxu0 %v189
    %236 = vmatprep.subr.bf16.mxu0 0
    %237 = vmatpush1.bf16.msra.mxu0 %v190
    %238 = vmatprep.subr.bf16.mxu0 0
    %239 = vmatpush1.bf16.msra.mxu0 %v191
    %240 = vmatprep.mubr.bf16.mxu0 %v105
    %241 = vmatmul.mubr.bf16.gmra.mrb[0].mxu0 %v104
    %v242 = vpop.f32.mrb[0].mxu0
    %v243 = vadd.f32 0.0, %v242
    %v244 = vpop.f32.mrb[0].mxu0
    %v245 = vpop.f32.mrb[0].mxu0
    %v246 = vadd.f32 0.0, %v245
    %v247 = vpop.f32.mrb[0].mxu0
    %248 = vmatprep.mubr.bf16.mxu0 %v107
    %249 = vmatmul.mubr.bf16.gmra.mrb[0].mxu0 %v106
    %v250 = vpop.f32.mrb[0].mxu0
    %v251 = vadd.f32 0.0, %v250
    %v252 = vpop.f32.mrb[0].mxu0
    %v253 = vpop.f32.mrb[0].mxu0
    %v254 = vadd.f32 0.0, %v253
    %v255 = vpop.f32.mrb[0].mxu0
    %256 = vdwg.mxu0
    %v257 = vadd.f32 %v52, %v243
    %v258 = vadd.f32 %v53, %v246
    %v259 = vadd.f32 %v54, %v251
    %v260 = vadd.f32 %v55, %v254
    %261 = vst [vmem:[#allocation2] sm:$0xff] %v257
    %262 = vst [vmem:[#allocation2 + $0x8] sm:$0xff] %v258
    %263 = vst [vmem:[#allocation2 + $0x10] sm:$0xff] %v259
    %264 = vst [vmem:[#allocation2 + $0x18] sm:$0xff] %v260
    // Predicated region
    $region26: #{tpu_custom_call.1} parent=1 // pred_check
      %p265 = pneg %p44
    $region27: #{tpu_custom_call.1} parent=1 // pred_check_branch
      %267 = sbr.rel (%p265) target = $region29
    $region28: #{tpu_custom_call.1} parent=1 // pred_region
      %v268 = vld [vmem:[#allocation2] sm:$0xff]
      %v269 = vld [vmem:[#allocation2 + $0x8] sm:$0xff]
      %v270 = vld [vmem:[#allocation2 + $0x10] sm:$0xff]
      %v271 = vld [vmem:[#allocation2 + $0x18] sm:$0xff]
      %v272 = vld [vmem:[%s2] sm:$0x1]
      %v274 = vlaneseq
      %v275 = vshrl.u32 %v274, 7
      %v276 = vsub.s32 0, %v275
      %v277 = vrot.slane %v272, %v276
      %v279 = vadd.f32 %v268, %v277
      %v280 = vadd.f32 %v269, %v277
      %v281 = vadd.f32 %v270, %v277
      %v282 = vadd.f32 %v271, %v277
      %283 = vst [vmem:[#allocation8] sm:$0xff] %v279
      %284 = vst [vmem:[#allocation8 + $0x8] sm:$0xff] %v280
      %285 = vst [vmem:[#allocation8 + $0x10] sm:$0xff] %v281
      %286 = vst [vmem:[#allocation8 + $0x18] sm:$0xff] %v282
    $region29: #{tpu_custom_call.1} parent=1 // pred_fallthru
      _
    // Predicated region
    $region30: #{tpu_custom_call.1} parent=1 // pred_check
      _
    $region31: #{tpu_custom_call.1} parent=1 // pred_check_branch
      %288 = sbr.rel (0) target = $region33
    $region32: #{tpu_custom_call.1} parent=1 // pred_region
      %s290 = ssub.s32 512, 512
      %291 = vsyncadd [#allocation5], %s290
      %s292 = sshll.u32 [#allocation8], 4
      %s293 = int_to_ptr.vmem [resolvable:$true] %s292
      %298 = dma.vmem_to_hbm [thread:$0]  %s293, 512, %s3, [#allocation5], 128, 128, 8
    $region33: #{tpu_custom_call.1} parent=1 // pred_fallthru
      _
    // Predicated region
    $region34: #{tpu_custom_call.1} parent=1 // pred_check
      _
    $region35: #{tpu_custom_call.1} parent=1 // pred_check_branch
      %300 = sbr.rel (0) target = $region37
    $region36: #{tpu_custom_call.1} parent=1 // pred_region
      %301 = dma.done [#allocation5], 512
    $region37: #{tpu_custom_call.1} parent=1 // pred_fallthru
      _
    %302 = vsyncpa [#allocation4], 1
    %303 = vsyncpa [#allocation7], 1
    %304 = vsyncpa [#allocation5], 1

</llo_original>
